<compile_context>
chip_gen: v6e
topology: v6e:2x2x1
jax: 0.10.0
libtpu: 0.0.40
codegen_flags: <defaults>
</compile_context>

<pallas_src>
import jax
import jax.numpy as jnp
from jax.experimental import pallas as pl
from jax.experimental.pallas import tpu as pltpu


def _scale_shift_kernel(x_ref, o_ref):
    # Elementwise hot path: y = x * 2 + 3 (the per-batch loop in the PyTorch
    # module is just elementwise over the whole tensor).
    o_ref[...] = x_ref[...] * 2 + 3


def _block_params():
    """Returns (target_block_bytes, vmem_limit_bytes_or_None) per TPU generation."""
    kind = ""
    try:
        kind = (getattr(jax.devices()[0], "device_kind", "") or "").lower()
    except Exception:
        pass
    if "v7" in kind:
        # v7x: ~3.2 TB/s HBM per TC but only 64 MiB VMEM (32 MiB scoped default).
        # 8 MiB blocks -> 4 double-buffered buffers = 32 MiB, so raise the limit.
        return 8 << 20, 40 << 20
    if "v6" in kind:
        # v6e: 1.4 TB/s HBM, 32 MiB scoped default. 4 MiB blocks -> 16 MiB, no override.
        return 4 << 20, None
    # v5e (0.82 TB/s, 16 MiB scoped default) and unknown chips: conservative 2 MiB.
    return 2 << 20, None


def _sublane_multiple(itemsize):
    # f32 -> 8, bf16/f16 -> 16, int8/fp8 -> 32 (sub-32-bit dtypes pack along sublanes).
    return {4: 8, 2: 16, 1: 32}.get(itemsize, 8)


def _run_2d(flat, rows, lane, dtype):
    """Runs the scale/shift kernel over a lane-dense (rows, lane) view of `flat`."""
    itemsize = jnp.dtype(dtype).itemsize
    sub = _sublane_multiple(itemsize)
    target_block_bytes, vmem_limit = _block_params()

    target_rows = max(sub, (target_block_bytes // (lane * itemsize)) // sub * sub)
    slab_bytes = rows * lane * itemsize

    if slab_bytes <= (1 << 20) or rows < 2 * sub:
        # Small slab: one block covering the full array (full-dim block shapes
        # are always legal regardless of the (8,128) divisibility rule).
        tile_rows = rows
    else:
        # At least 2 grid steps so both v7x TensorCores get work; blocks capped
        # at the generation-dependent target size. Ragged last block is fine.
        half_rows = max(sub, ((rows + 1) // 2) // sub * sub)
        tile_rows = min(target_rows, half_rows)

    grid = (pl.cdiv(rows, tile_rows),)
    x2d = flat.reshape(rows, lane)

    cp_kwargs = dict(dimension_semantics=("parallel",))
    if vmem_limit is not None:
        cp_kwargs["vmem_limit_bytes"] = vmem_limit

    out2d = pl.pallas_call(
        _scale_shift_kernel,
        out_shape=jax.ShapeDtypeStruct((rows, lane), dtype),
        grid=grid,
        in_specs=[pl.BlockSpec((tile_rows, lane), lambda i: (i, 0))],
        out_specs=pl.BlockSpec((tile_rows, lane), lambda i: (i, 0)),
        compiler_params=pltpu.CompilerParams(**cp_kwargs),
    )(x2d)
    return out2d.reshape(-1)


def pt_module_forward(x):
    """Computes x * 2 + 3 elementwise via a Pallas TPU kernel (any shape/dtype)."""
    orig_shape = x.shape
    dtype = x.dtype
    n = x.size
    if n == 0:
        return x

    flat = jnp.ravel(x)

    # Widest lane dimension that divides n -> unmasked, lane-dense stores and
    # no padding in the common case (NN tensor sizes are multiples of 128).
    lane = None
    for cand in (1024, 512, 256, 128):
        if n % cand == 0:
            lane = cand
            break

    if lane is not None:
        out_flat = _run_2d(flat, n // lane, lane, dtype)
    else:
        # Ragged fallback: run the kernel on the multiple-of-128 prefix and
        # handle the <128-element tail with a tiny plain-XLA epilogue (no
        # full-array pad / slice passes).
        # TODO(synk): fold the tail into a masked final block (pltpu.store with
        # a lane mask) to also eliminate the concatenate pass.
        lane = 128
        n_main = (n // lane) * lane
        tail = flat[n_main:] * 2 + 3
        if n_main == 0:
            out_flat = tail
        else:
            main = _run_2d(flat[:n_main], n_main // lane, lane, dtype)
            out_flat = jnp.concatenate([main, tail])

    return out_flat.reshape(orig_shape)


if __name__ == "__main__":
    key = jax.random.PRNGKey(0)

    # Small NCHW input consistent with the module's generic forward.
    x = jax.random.normal(key, (2, 4, 16, 16), dtype=jnp.float32)
    out = jax.block_until_ready(pt_module_forward(x))
    ref = x * 2.0 + 3.0
    assert out.shape == x.shape
    assert jnp.allclose(out, ref, atol=1e-6), "mismatch vs reference (aligned case)"

    # Extra smoke test for the ragged (non-multiple-of-128) fallback path.
    x2 = jax.random.normal(jax.random.PRNGKey(1), (5, 77), dtype=jnp.float32)
    out2 = jax.block_until_ready(pt_module_forward(x2))
    ref2 = x2 * 2.0 + 3.0
    assert out2.shape == x2.shape
    assert jnp.allclose(out2, ref2, atol=1e-6), "mismatch vs reference (ragged case)"

    print("KERNEL_OK")
</pallas_src>

<mosaic_0001>
module attributes {stable_mosaic.version = 11 : i64} {
  func.func @_scale_shift_kernel(%arg0: i32, %arg1: memref<2x1024xf32, #tpu.memory_space<vmem>>, %arg2: memref<2x1024xf32, #tpu.memory_space<vmem>>) attributes {dimension_semantics = [#tpu.dimension_semantics<parallel>], iteration_bounds = array<i64: 1>, scalar_prefetch = 0 : i64, scratch_operands = 0 : i64, tpu.core_type = #tpu.core_type<tc>, window_params = [{transform_indices = @transform_0, window_bounds = array<i64: 2, 1024>}, {transform_indices = @transform_1, window_bounds = array<i64: 2, 1024>}]} {
    %c0 = arith.constant 0 : index
    %c0_0 = arith.constant 0 : index
    %0 = vector.load %arg1[%c0, %c0_0] : memref<2x1024xf32, #tpu.memory_space<vmem>>, vector<2x1024xf32>
    %cst = arith.constant 2.000000e+00 : f32
    %1 = vector.broadcast %cst : f32 to vector<2x1024xf32>
    %2 = arith.mulf %0, %1 : vector<2x1024xf32>
    %cst_1 = arith.constant 3.000000e+00 : f32
    %3 = vector.broadcast %cst_1 : f32 to vector<2x1024xf32>
    %4 = arith.addf %2, %3 : vector<2x1024xf32>
    %c0_2 = arith.constant 0 : index
    %c0_3 = arith.constant 0 : index
    %5 = vector.load %arg2[%c0_2, %c0_3] : memref<2x1024xf32, #tpu.memory_space<vmem>>, vector<2x1024xf32>
    tpu.vector_store %arg2[%c0_2, %c0_3], %4 {strides = array<i32>} : memref<2x1024xf32, #tpu.memory_space<vmem>>, vector<2x1024xf32>,
    return
  }
  func.func @transform_0(%arg0: i32) -> (i32, i32) {
    %c0_i32 = arith.constant 0 : i32
    %c0_i32_0 = arith.constant 0 : i32
    return %arg0, %c0_i32 : i32, i32
  }
  func.func @transform_1(%arg0: i32) -> (i32, i32) {
    %c0_i32 = arith.constant 0 : i32
    %c0_i32_0 = arith.constant 0 : i32
    return %arg0, %c0_i32 : i32, i32
  }
}

</mosaic_0001>

<llo_original>
// kernel: tpu_custom_call.1
$region0: #{tpu_custom_call.1}
  #allocation0 [shape = 'u32[]', space=smem, size = 0x4, offset = 0x4, fixed_abs, tag = 'smem constant byte address 0x4 - core index']
  #allocation1 [shape = 'u32[144,128]{1,0:T(1,128)}', space=vmem, size = 0x12000, scoped, tag = 'internal scratch']
  %s0 = inlined_call_operand.hbm [shape: f32[2,1024], index: 0, kind: input, shape index: {}]
  %s1 = inlined_call_operand.hbm [shape: f32[2,1024], index: 1, kind: output, shape index: {}]
  %s2 = sld [smem:[#allocation0]]
  $region18: #{tpu_custom_call.1} parent=0
    _
  %s4 = ssub.s32 1, %s2
  %s5 = scalar_select 0, %s4, %s2
  $region1: #{tpu_custom_call.1} parent=0
    #allocation2 [shape = 'u8[8192]{0}', space=vmem, size = 0x2000, scoped, tag = 'input window, operand 0, single buffered']
    #allocation3 [shape = 's32[1]{0}', space=sflag, size = 0x4, scoped, tag = 'scoped memory for tpu_custom_call.1']
    #allocation4 [shape = 's32[1]{0}', space=sflag, size = 0x4, scoped, tag = 'scoped memory for tpu_custom_call.1']
    #allocation5 [shape = 'u8[8192]{0}', space=vmem, size = 0x2000, scoped, tag = 'output window, operand 0, single buffered']
    %6 = vsyncpa [#allocation3], 0
    %7 = vsyncpa [#allocation4], 0
    // Predicated region
    $region2: #{tpu_custom_call.1} parent=1 // pred_check
      _
    $region3: #{tpu_custom_call.1} parent=1 // pred_check_branch
      %9 = sbr.rel (0) target = $region5
    $region4: #{tpu_custom_call.1} parent=1 // pred_region
      %s11 = ssub.s32 256, 256
      %12 = vsyncadd [#allocation3], %s11
      %s14 = sshll.u32 [#allocation2], 4
      %s15 = int_to_ptr.vmem [resolvable:$true] %s14
      %17 = dma.hbm_to_vmem [thread:$0]  %s0, 256, %s15, [#allocation3]
    $region5: #{tpu_custom_call.1} parent=1 // pred_fallthru
      _
    // Predicated region
    $region6: #{tpu_custom_call.1} parent=1 // pred_check
      _
    $region7: #{tpu_custom_call.1} parent=1 // pred_check_branch
      %19 = sbr.rel (0) target = $region9
    $region8: #{tpu_custom_call.1} parent=1 // pred_region
      %20 = dma.done [#allocation3], 256
    $region9: #{tpu_custom_call.1} parent=1 // pred_fallthru
      _
    %v21 = vld [vmem:[#allocation2] sm:$0xff]
    %v22 = vld [vmem:[#allocation2 + $0x8] sm:$0xff]
    %v23 = vmul.f32 %v21, 2.0
    %v24 = vmul.f32 %v22, 2.0
    %v25 = vadd.f32 %v23, 3.0
    %v26 = vadd.f32 %v24, 3.0
    %27 = vst [vmem:[#allocation5] sm:$0xff] %v25
    %28 = vst [vmem:[#allocation5 + $0x8] sm:$0xff] %v26
    // Predicated region
    $region10: #{tpu_custom_call.1} parent=1 // pred_check
      _
    $region11: #{tpu_custom_call.1} parent=1 // pred_check_branch
      %30 = sbr.rel (0) target = $region13
    $region12: #{tpu_custom_call.1} parent=1 // pred_region
      %s32 = ssub.s32 256, 256
      %33 = vsyncadd [#allocation4], %s32
      %s35 = sshll.u32 [#allocation5], 4
      %s36 = int_to_ptr.vmem [resolvable:$true] %s35
      %38 = dma.vmem_to_hbm [thread:$0]  %s36, 256, %s1, [#allocation4]
    $region13: #{tpu_custom_call.1} parent=1 // pred_fallthru
      _
    // Predicated region
    $region14: #{tpu_custom_call.1} parent=1 // pred_check
      _
    $region15: #{tpu_custom_call.1} parent=1 // pred_check_branch
      %40 = sbr.rel (0) target = $region17
    $region16: #{tpu_custom_call.1} parent=1 // pred_region
      %41 = dma.done [#allocation4], 256
    $region17: #{tpu_custom_call.1} parent=1 // pred_fallthru
      _
    %42 = vsyncpa [#allocation3], 1
    %43 = vsyncpa [#allocation4], 1

</llo_original>
